<compile_context>
chip_gen: v7x
topology: tpu7x:2x2x1
jax: 0.10.0
libtpu: 0.0.40
codegen_flags: <defaults>
</compile_context>

<pallas_src>
import jax
import jax.numpy as jnp
from jax.experimental import pallas as pl
from jax.experimental.pallas import tpu as pltpu

EPS = 1e-5  # torch.nn.LayerNorm default eps


# ---------------------------------------------------------------------------
# Kernel
# ---------------------------------------------------------------------------
def _ln(x, gamma, beta):
    """Row-wise LayerNorm over the last (hidden/lane) dim, f32 math."""
    mu = jnp.mean(x, axis=-1, keepdims=True)
    var = jnp.mean((x - mu) ** 2, axis=-1, keepdims=True)
    return (x - mu) * jax.lax.rsqrt(var + EPS) * gamma + beta


def _pyramid_kernel(x_ref, wl_ref, wr_ref, bias_ref,
                    ig_ref, ib_ref, ng_ref, nb_ref,
                    o_ref, h_scr):
    """One grid step = (batch b, pyramid level i).

    Level 0: h = norm(input_encoding_norm(x))            -> scratch, output[0, b]
    Level i: h = norm(xl @ Wl + xr @ Wr + bias)           -> scratch, output[i, b]
             where xl = h_prev[:-1], xr = h_prev[1:].
    Rows >= T - i of the scratch/output are stale garbage; the wrapper slices
    each level to its valid T - i tokens (matches the shrinking pyramid).
    """
    lvl = pl.program_id(1)
    T = h_scr.shape[0]

    @pl.when(lvl == 0)
    def _():
        x = x_ref[0].astype(jnp.float32)                               # (T, H)
        x = _ln(x, ig_ref[...].astype(jnp.float32),
                ib_ref[...].astype(jnp.float32))                       # input_encoding_norm
        x = _ln(x, ng_ref[...].astype(jnp.float32),
                nb_ref[...].astype(jnp.float32))                       # norm
        h_scr[...] = x

    @pl.when(lvl > 0)
    def _():
        xl = h_scr[pl.ds(0, T - 1), :]                                 # h[:-1]
        xr = h_scr[pl.ds(1, T - 1), :]                                 # h[1:]
        # cat([xl, xr], -1) @ W.T  ==  xl @ Wl + xr @ Wr   (exact split)
        y = (jnp.dot(xl, wl_ref[...], preferred_element_type=jnp.float32)
             + jnp.dot(xr, wr_ref[...], preferred_element_type=jnp.float32)
             + bias_ref[...].astype(jnp.float32))
        y = _ln(y, ng_ref[...].astype(jnp.float32),
                nb_ref[...].astype(jnp.float32))
        h_scr[pl.ds(0, T - 1), :] = y                                  # carry for next level

    o_ref[0, 0] = h_scr[...].astype(o_ref.dtype)


# ---------------------------------------------------------------------------
# Wrapper: PyramidFeatureNet forward (pyramid head)
# ---------------------------------------------------------------------------
def pyramid_feature_net_forward(encoder_outputs, token_masks, params, fpn_layers=8):
    """Mirrors PyramidFeatureNet.forward after the encoder call.

    encoder_outputs: [B, T, H] float32
    token_masks:     [B, T]    bool
    """
    B, T, H = encoder_outputs.shape
    padding_mask = ~token_masks
    num_layer = min(fpn_layers, T)

    feats = pl.pallas_call(
        _pyramid_kernel,
        out_shape=jax.ShapeDtypeStruct((num_layer, B, T, H), encoder_outputs.dtype),
        grid=(B, num_layer),
        in_specs=[
            pl.BlockSpec((1, T, H), lambda b, i: (b, 0, 0)),   # encoder outputs (per batch)
            pl.BlockSpec((H, H), lambda b, i: (0, 0)),         # Wl (resident)
            pl.BlockSpec((H, H), lambda b, i: (0, 0)),         # Wr (resident)
            pl.BlockSpec((1, H), lambda b, i: (0, 0)),         # combine bias
            pl.BlockSpec((1, H), lambda b, i: (0, 0)),         # input_encoding_norm gamma
            pl.BlockSpec((1, H), lambda b, i: (0, 0)),         # input_encoding_norm beta
            pl.BlockSpec((1, H), lambda b, i: (0, 0)),         # norm gamma
            pl.BlockSpec((1, H), lambda b, i: (0, 0)),         # norm beta
        ],
        out_specs=pl.BlockSpec((1, 1, T, H), lambda b, i: (i, b, 0, 0)),
        scratch_shapes=[pltpu.VMEM((T, H), jnp.float32)],      # h carried across levels
        compiler_params=pltpu.CompilerParams(
            dimension_semantics=("parallel", "arbitrary"),
            vmem_limit_bytes=48 * 1024 * 1024,
        ),
    )(encoder_outputs,
      params["wl"], params["wr"], params["bias"],
      params["in_gamma"], params["in_beta"],
      params["norm_gamma"], params["norm_beta"])

    # self.dropout_layer: identity at inference.
    layer_features = [feats[i, :, : T - i, :] for i in range(num_layer)]
    layer_padding_mask = [padding_mask[:, i:] for i in range(num_layer)]

    return {
        "encoder_outputs": encoder_outputs,
        "features_list": layer_features,
        "padding_masks_list": layer_padding_mask,
    }


# ---------------------------------------------------------------------------
# Deterministic parameter init (matches __init__ shapes / init_linear)
# ---------------------------------------------------------------------------
def make_params(key, hidden_size):
    H = hidden_size
    # combine_layer: nn.Linear(2H, H); init_linear -> uniform(-b, b), b = sqrt(6/(H + 2H))
    bound = (6.0 / (H + 2 * H)) ** 0.5
    W = jax.random.uniform(key, (H, 2 * H), minval=-bound, maxval=bound,
                           dtype=jnp.float32)
    return dict(
        wl=W[:, :H].T,                       # [H_in_left, H_out]
        wr=W[:, H:].T,                       # [H_in_right, H_out]
        bias=jnp.zeros((1, H), jnp.float32),
        in_gamma=jnp.ones((1, H), jnp.float32),
        in_beta=jnp.zeros((1, H), jnp.float32),
        norm_gamma=jnp.ones((1, H), jnp.float32),
        norm_beta=jnp.zeros((1, H), jnp.float32),
    )


# ---------------------------------------------------------------------------
# Pure-JAX reference (for correctness check only)
# ---------------------------------------------------------------------------
def _ln_ref(x, g, b):
    mu = jnp.mean(x, axis=-1, keepdims=True)
    var = jnp.mean((x - mu) ** 2, axis=-1, keepdims=True)
    return (x - mu) / jnp.sqrt(var + EPS) * g + b


def reference_forward(enc, token_masks, params, fpn_layers=8):
    B, T, H = enc.shape
    pm = ~token_masks
    W = jnp.concatenate([params["wl"], params["wr"]], axis=0)   # [2H, H]
    h = _ln_ref(enc, params["in_gamma"][0], params["in_beta"][0])
    num_layer = min(fpn_layers, T)
    feats, masks = [], []
    for i in range(num_layer):
        if i == 0:
            mask = pm
        else:
            cat = jnp.concatenate([h[:, :-1], h[:, 1:]], axis=-1)
            h = cat @ W + params["bias"][0]
            mask = pm[:, i:]
        masks.append(mask)
        h = _ln_ref(h, params["norm_gamma"][0], params["norm_beta"][0])
        feats.append(h)
    return {"features_list": feats, "padding_masks_list": masks}


if __name__ == "__main__":
    B, T, H = 2, 8, 32          # batch, seq, hidden_size
    FPN_LAYERS = 8

    key = jax.random.PRNGKey(0)
    k_x, k_w = jax.random.split(key)

    encoder_outputs = jax.random.normal(k_x, (B, T, H), dtype=jnp.float32)
    token_masks = jnp.ones((B, T), dtype=bool).at[1, -2:].set(False)

    params = make_params(k_w, H)

    out = pyramid_feature_net_forward(encoder_outputs, token_masks, params,
                                      fpn_layers=FPN_LAYERS)
    jax.block_until_ready(out["features_list"])

    # sanity: pyramid shapes T, T-1, ..., T-num_layer+1 + numerics vs pure-JAX ref
    num_layer = min(FPN_LAYERS, T)
    assert len(out["features_list"]) == num_layer
    ref = reference_forward(encoder_outputs, token_masks, params, fpn_layers=FPN_LAYERS)
    for i, (f, m) in enumerate(zip(out["features_list"], out["padding_masks_list"])):
        assert f.shape == (B, T - i, H), f.shape
        assert m.shape == (B, T - i), m.shape
        err = float(jnp.max(jnp.abs(f - ref["features_list"][i])))
        assert err < 1e-4, (i, err)
        assert bool(jnp.all(m == ref["padding_masks_list"][i]))

    print("KERNEL_OK")
</pallas_src>

<mosaic_0001>
module attributes {stable_mosaic.version = 11 : i64} {
  func.func @_pyramid_kernel(%arg0: i32, %arg1: i32, %arg2: memref<1x8x32xf32, #tpu.memory_space<vmem>>, %arg3: memref<32x32xf32, #tpu.memory_space<vmem>>, %arg4: memref<32x32xf32, #tpu.memory_space<vmem>>, %arg5: memref<1x32xf32, #tpu.memory_space<vmem>>, %arg6: memref<1x32xf32, #tpu.memory_space<vmem>>, %arg7: memref<1x32xf32, #tpu.memory_space<vmem>>, %arg8: memref<1x32xf32, #tpu.memory_space<vmem>>, %arg9: memref<1x32xf32, #tpu.memory_space<vmem>>, %arg10: memref<1x1x8x32xf32, #tpu.memory_space<vmem>>, %arg11: memref<8x32xf32, #tpu.memory_space<vmem>>) attributes {dimension_semantics = [#tpu.dimension_semantics<parallel>, #tpu.dimension_semantics<arbitrary>], iteration_bounds = array<i64: 2, 8>, scalar_prefetch = 0 : i64, scratch_operands = 1 : i64, tpu.core_type = #tpu.core_type<tc>, window_params = [{transform_indices = @transform_0, window_bounds = array<i64: 1, 8, 32>}, {pipeline_mode = #tpu.pipeline_mode<synchronous>, transform_indices = @transform_1, window_bounds = array<i64: 32, 32>}, {pipeline_mode = #tpu.pipeline_mode<synchronous>, transform_indices = @transform_2, window_bounds = array<i64: 32, 32>}, {pipeline_mode = #tpu.pipeline_mode<synchronous>, transform_indices = @transform_3, window_bounds = array<i64: 1, 32>}, {pipeline_mode = #tpu.pipeline_mode<synchronous>, transform_indices = @transform_4, window_bounds = array<i64: 1, 32>}, {pipeline_mode = #tpu.pipeline_mode<synchronous>, transform_indices = @transform_5, window_bounds = array<i64: 1, 32>}, {pipeline_mode = #tpu.pipeline_mode<synchronous>, transform_indices = @transform_6, window_bounds = array<i64: 1, 32>}, {pipeline_mode = #tpu.pipeline_mode<synchronous>, transform_indices = @transform_7, window_bounds = array<i64: 1, 32>}, {transform_indices = @transform_8, window_bounds = array<i64: 1, 1, 8, 32>}]} {
    %c0_i32 = arith.constant 0 : i32
    %0 = arith.cmpi eq, %arg1, %c0_i32 : i32
    %1 = arith.extui %0 : i1 to i32
    %c0_i32_0 = arith.constant 0 : i32
    %2 = arith.cmpi ne, %1, %c0_i32_0 : i32
    scf.if %2 {
      %c0_8 = arith.constant 0 : index
      %c0_9 = arith.constant 0 : index
      %c0_10 = arith.constant 0 : index
      %10 = vector.load %arg2[%c0_8, %c0_9, %c0_10] : memref<1x8x32xf32, #tpu.memory_space<vmem>>, vector<1x8x32xf32>
      %11 = vector.shape_cast %10 : vector<1x8x32xf32> to vector<8x32xf32>
      %c0_11 = arith.constant 0 : index
      %c0_12 = arith.constant 0 : index
      %12 = vector.load %arg6[%c0_11, %c0_12] : memref<1x32xf32, #tpu.memory_space<vmem>>, vector<1x32xf32>
      %c0_13 = arith.constant 0 : index
      %c0_14 = arith.constant 0 : index
      %13 = vector.load %arg7[%c0_13, %c0_14] : memref<1x32xf32, #tpu.memory_space<vmem>>, vector<1x32xf32>
      %cst = arith.constant dense<0.000000e+00> : vector<8xf32>
      %14 = vector.multi_reduction <add>, %11, %cst [1] : vector<8x32xf32> to vector<8xf32>
      %15 = vector.shape_cast %14 : vector<8xf32> to vector<8x1xf32>
      %cst_15 = arith.constant 3.200000e+01 : f32
      %16 = vector.broadcast %cst_15 : f32 to vector<8x1xf32>
      %17 = arith.divf %15, %16 : vector<8x1xf32>
      %18 = vector.broadcast %17 : vector<8x1xf32> to vector<8x32xf32>
      %19 = arith.subf %11, %18 : vector<8x32xf32>
      %20 = arith.mulf %19, %19 : vector<8x32xf32>
      %cst_16 = arith.constant dense<0.000000e+00> : vector<8xf32>
      %21 = vector.multi_reduction <add>, %20, %cst_16 [1] : vector<8x32xf32> to vector<8xf32>
      %22 = vector.shape_cast %21 : vector<8xf32> to vector<8x1xf32>
      %cst_17 = arith.constant 3.200000e+01 : f32
      %23 = vector.broadcast %cst_17 : f32 to vector<8x1xf32>
      %24 = arith.divf %22, %23 : vector<8x1xf32>
      %25 = vector.broadcast %17 : vector<8x1xf32> to vector<8x32xf32>
      %26 = arith.subf %11, %25 : vector<8x32xf32>
      %cst_18 = arith.constant 9.99999974E-6 : f32
      %27 = vector.broadcast %cst_18 : f32 to vector<8x1xf32>
      %28 = arith.addf %24, %27 : vector<8x1xf32>
      %29 = math.rsqrt %28 : vector<8x1xf32>
      %30 = vector.broadcast %29 : vector<8x1xf32> to vector<8x32xf32>
      %31 = arith.mulf %26, %30 : vector<8x32xf32>
      %32 = vector.broadcast %12 : vector<1x32xf32> to vector<8x32xf32>
      %33 = arith.mulf %31, %32 : vector<8x32xf32>
      %34 = vector.broadcast %13 : vector<1x32xf32> to vector<8x32xf32>
      %35 = arith.addf %33, %34 : vector<8x32xf32>
      %c0_19 = arith.constant 0 : index
      %c0_20 = arith.constant 0 : index
      %36 = vector.load %arg8[%c0_19, %c0_20] : memref<1x32xf32, #tpu.memory_space<vmem>>, vector<1x32xf32>
      %c0_21 = arith.constant 0 : index
      %c0_22 = arith.constant 0 : index
      %37 = vector.load %arg9[%c0_21, %c0_22] : memref<1x32xf32, #tpu.memory_space<vmem>>, vector<1x32xf32>
      %cst_23 = arith.constant dense<0.000000e+00> : vector<8xf32>
      %38 = vector.multi_reduction <add>, %35, %cst_23 [1] : vector<8x32xf32> to vector<8xf32>
      %39 = vector.shape_cast %38 : vector<8xf32> to vector<8x1xf32>
      %cst_24 = arith.constant 3.200000e+01 : f32
      %40 = vector.broadcast %cst_24 : f32 to vector<8x1xf32>
      %41 = arith.divf %39, %40 : vector<8x1xf32>
      %42 = vector.broadcast %41 : vector<8x1xf32> to vector<8x32xf32>
      %43 = arith.subf %35, %42 : vector<8x32xf32>
      %44 = arith.mulf %43, %43 : vector<8x32xf32>
      %cst_25 = arith.constant dense<0.000000e+00> : vector<8xf32>
      %45 = vector.multi_reduction <add>, %44, %cst_25 [1] : vector<8x32xf32> to vector<8xf32>
      %46 = vector.shape_cast %45 : vector<8xf32> to vector<8x1xf32>
      %cst_26 = arith.constant 3.200000e+01 : f32
      %47 = vector.broadcast %cst_26 : f32 to vector<8x1xf32>
      %48 = arith.divf %46, %47 : vector<8x1xf32>
      %49 = vector.broadcast %41 : vector<8x1xf32> to vector<8x32xf32>
      %50 = arith.subf %35, %49 : vector<8x32xf32>
      %cst_27 = arith.constant 9.99999974E-6 : f32
      %51 = vector.broadcast %cst_27 : f32 to vector<8x1xf32>
      %52 = arith.addf %48, %51 : vector<8x1xf32>
      %53 = math.rsqrt %52 : vector<8x1xf32>
      %54 = vector.broadcast %53 : vector<8x1xf32> to vector<8x32xf32>
      %55 = arith.mulf %50, %54 : vector<8x32xf32>
      %56 = vector.broadcast %36 : vector<1x32xf32> to vector<8x32xf32>
      %57 = arith.mulf %55, %56 : vector<8x32xf32>
      %58 = vector.broadcast %37 : vector<1x32xf32> to vector<8x32xf32>
      %59 = arith.addf %57, %58 : vector<8x32xf32>
      %c0_28 = arith.constant 0 : index
      %c0_29 = arith.constant 0 : index
      %60 = vector.load %arg11[%c0_28, %c0_29] : memref<8x32xf32, #tpu.memory_space<vmem>>, vector<8x32xf32>
      tpu.vector_store %arg11[%c0_28, %c0_29], %59 {strides = array<i32>} : memref<8x32xf32, #tpu.memory_space<vmem>>, vector<8x32xf32>,
    } else {
    }
    %c0_i32_1 = arith.constant 0 : i32
    %3 = arith.cmpi sgt, %arg1, %c0_i32_1 : i32
    %4 = arith.extui %3 : i1 to i32
    %c0_i32_2 = arith.constant 0 : i32
    %5 = arith.cmpi ne, %4, %c0_i32_2 : i32
    scf.if %5 {
      %c0_8 = arith.constant 0 : index
      %c0_9 = arith.constant 0 : index
      %10 = vector.load %arg11[%c0_8, %c0_9] : memref<8x32xf32, #tpu.memory_space<vmem>>, vector<7x32xf32>
      %c1 = arith.constant 1 : index
      %c0_10 = arith.constant 0 : index
      %11 = vector.load %arg11[%c1, %c0_10] : memref<8x32xf32, #tpu.memory_space<vmem>>, vector<7x32xf32>
      %c0_11 = arith.constant 0 : index
      %c0_12 = arith.constant 0 : index
      %12 = vector.load %arg3[%c0_11, %c0_12] : memref<32x32xf32, #tpu.memory_space<vmem>>, vector<32x32xf32>
      %cst = arith.constant dense<0.000000e+00> : vector<7x32xf32>
      %13 = tpu.matmul %10, %12, %cst {dimension_numbers = #tpu.dot_dimension_numbers<[1], [0], [0], [1], [0, 0, 1, 1], [], []>} : vector<7x32xf32>, vector<32x32xf32>, vector<7x32xf32> -> vector<7x32xf32>
      %c0_13 = arith.constant 0 : index
      %c0_14 = arith.constant 0 : index
      %14 = vector.load %arg4[%c0_13, %c0_14] : memref<32x32xf32, #tpu.memory_space<vmem>>, vector<32x32xf32>
      %cst_15 = arith.constant dense<0.000000e+00> : vector<7x32xf32>
      %15 = tpu.matmul %11, %14, %cst_15 {dimension_numbers = #tpu.dot_dimension_numbers<[1], [0], [0], [1], [0, 0, 1, 1], [], []>} : vector<7x32xf32>, vector<32x32xf32>, vector<7x32xf32> -> vector<7x32xf32>
      %16 = arith.addf %13, %15 : vector<7x32xf32>
      %c0_16 = arith.constant 0 : index
      %c0_17 = arith.constant 0 : index
      %17 = vector.load %arg5[%c0_16, %c0_17] : memref<1x32xf32, #tpu.memory_space<vmem>>, vector<1x32xf32>
      %18 = vector.broadcast %17 : vector<1x32xf32> to vector<7x32xf32>
      %19 = arith.addf %16, %18 : vector<7x32xf32>
      %c0_18 = arith.constant 0 : index
      %c0_19 = arith.constant 0 : index
      %20 = vector.load %arg8[%c0_18, %c0_19] : memref<1x32xf32, #tpu.memory_space<vmem>>, vector<1x32xf32>
      %c0_20 = arith.constant 0 : index
      %c0_21 = arith.constant 0 : index
      %21 = vector.load %arg9[%c0_20, %c0_21] : memref<1x32xf32, #tpu.memory_space<vmem>>, vector<1x32xf32>
      %cst_22 = arith.constant dense<0.000000e+00> : vector<7xf32>
      %22 = vector.multi_reduction <add>, %19, %cst_22 [1] : vector<7x32xf32> to vector<7xf32>
      %23 = vector.shape_cast %22 : vector<7xf32> to vector<7x1xf32>
      %cst_23 = arith.constant 3.200000e+01 : f32
      %24 = vector.broadcast %cst_23 : f32 to vector<7x1xf32>
      %25 = arith.divf %23, %24 : vector<7x1xf32>
      %26 = vector.broadcast %25 : vector<7x1xf32> to vector<7x32xf32>
      %27 = arith.subf %19, %26 : vector<7x32xf32>
      %28 = arith.mulf %27, %27 : vector<7x32xf32>
      %cst_24 = arith.constant dense<0.000000e+00> : vector<7xf32>
      %29 = vector.multi_reduction <add>, %28, %cst_24 [1] : vector<7x32xf32> to vector<7xf32>
      %30 = vector.shape_cast %29 : vector<7xf32> to vector<7x1xf32>
      %cst_25 = arith.constant 3.200000e+01 : f32
      %31 = vector.broadcast %cst_25 : f32 to vector<7x1xf32>
      %32 = arith.divf %30, %31 : vector<7x1xf32>
      %33 = vector.broadcast %25 : vector<7x1xf32> to vector<7x32xf32>
      %34 = arith.subf %19, %33 : vector<7x32xf32>
      %cst_26 = arith.constant 9.99999974E-6 : f32
      %35 = vector.broadcast %cst_26 : f32 to vector<7x1xf32>
      %36 = arith.addf %32, %35 : vector<7x1xf32>
      %37 = math.rsqrt %36 : vector<7x1xf32>
      %38 = vector.broadcast %37 : vector<7x1xf32> to vector<7x32xf32>
      %39 = arith.mulf %34, %38 : vector<7x32xf32>
      %40 = vector.broadcast %20 : vector<1x32xf32> to vector<7x32xf32>
      %41 = arith.mulf %39, %40 : vector<7x32xf32>
      %42 = vector.broadcast %21 : vector<1x32xf32> to vector<7x32xf32>
      %43 = arith.addf %41, %42 : vector<7x32xf32>
      %c0_27 = arith.constant 0 : index
      %c0_28 = arith.constant 0 : index
      %44 = vector.load %arg11[%c0_27, %c0_28] : memref<8x32xf32, #tpu.memory_space<vmem>>, vector<7x32xf32>
      tpu.vector_store %arg11[%c0_27, %c0_28], %43 {strides = array<i32>} : memref<8x32xf32, #tpu.memory_space<vmem>>, vector<7x32xf32>,
    } else {
    }
    %c0 = arith.constant 0 : index
    %c0_3 = arith.constant 0 : index
    %6 = vector.load %arg11[%c0, %c0_3] : memref<8x32xf32, #tpu.memory_space<vmem>>, vector<8x32xf32>
    %c0_4 = arith.constant 0 : index
    %c0_5 = arith.constant 0 : index
    %c0_6 = arith.constant 0 : index
    %c0_7 = arith.constant 0 : index
    %7 = vector.load %arg10[%c0_4, %c0_5, %c0_6, %c0_7] : memref<1x1x8x32xf32, #tpu.memory_space<vmem>>, vector<1x1x8x32xf32>
    %8 = vector.shape_cast %7 : vector<1x1x8x32xf32> to vector<8x32xf32>
    %9 = vector.shape_cast %6 : vector<8x32xf32> to vector<1x1x8x32xf32>
    tpu.vector_store %arg10[%c0_4, %c0_5, %c0_6, %c0_7], %9 {strides = array<i32>} : memref<1x1x8x32xf32, #tpu.memory_space<vmem>>, vector<1x1x8x32xf32>,
    return
  }
  func.func @transform_0(%arg0: i32, %arg1: i32) -> (i32, i32, i32) {
    %c0_i32 = arith.constant 0 : i32
    %c0_i32_0 = arith.constant 0 : i32
    %c0_i32_1 = arith.constant 0 : i32
    return %arg0, %c0_i32, %c0_i32_0 : i32, i32, i32
  }
  func.func @transform_1(%arg0: i32, %arg1: i32) -> (i32, i32) {
    %c0_i32 = arith.constant 0 : i32
    %c0_i32_0 = arith.constant 0 : i32
    %c0_i32_1 = arith.constant 0 : i32
    return %c0_i32, %c0_i32_0 : i32, i32
  }
  func.func @transform_2(%arg0: i32, %arg1: i32) -> (i32, i32) {
    %c0_i32 = arith.constant 0 : i32
    %c0_i32_0 = arith.constant 0 : i32
    %c0_i32_1 = arith.constant 0 : i32
    return %c0_i32, %c0_i32_0 : i32, i32
  }
  func.func @transform_3(%arg0: i32, %arg1: i32) -> (i32, i32) {
    %c0_i32 = arith.constant 0 : i32
    %c0_i32_0 = arith.constant 0 : i32
    %c0_i32_1 = arith.constant 0 : i32
    return %c0_i32, %c0_i32_0 : i32, i32
  }
  func.func @transform_4(%arg0: i32, %arg1: i32) -> (i32, i32) {
    %c0_i32 = arith.constant 0 : i32
    %c0_i32_0 = arith.constant 0 : i32
    %c0_i32_1 = arith.constant 0 : i32
    return %c0_i32, %c0_i32_0 : i32, i32
  }
  func.func @transform_5(%arg0: i32, %arg1: i32) -> (i32, i32) {
    %c0_i32 = arith.constant 0 : i32
    %c0_i32_0 = arith.constant 0 : i32
    %c0_i32_1 = arith.constant 0 : i32
    return %c0_i32, %c0_i32_0 : i32, i32
  }
  func.func @transform_6(%arg0: i32, %arg1: i32) -> (i32, i32) {
    %c0_i32 = arith.constant 0 : i32
    %c0_i32_0 = arith.constant 0 : i32
    %c0_i32_1 = arith.constant 0 : i32
    return %c0_i32, %c0_i32_0 : i32, i32
  }
  func.func @transform_7(%arg0: i32, %arg1: i32) -> (i32, i32) {
    %c0_i32 = arith.constant 0 : i32
    %c0_i32_0 = arith.constant 0 : i32
    %c0_i32_1 = arith.constant 0 : i32
    return %c0_i32, %c0_i32_0 : i32, i32
  }
  func.func @transform_8(%arg0: i32, %arg1: i32) -> (i32, i32, i32, i32) {
    %c0_i32 = arith.constant 0 : i32
    %c0_i32_0 = arith.constant 0 : i32
    %c0_i32_1 = arith.constant 0 : i32
    return %arg1, %arg0, %c0_i32, %c0_i32_0 : i32, i32, i32, i32
  }
}

</mosaic_0001>

<llo_original>
// kernel: tpu_custom_call.1
$region0: #{tpu_custom_call.1}
  #allocation0 [shape = 'u32[]', space=smem, size = 0x4, offset = 0x4, fixed_abs, tag = 'smem constant byte address 0x4 - core index']
  #allocation1 [shape = 'u32[144,128]{1,0:T(1,128)}', space=vmem, size = 0x12000, scoped, tag = 'internal scratch']
  #allocation2 [shape = 'f32[8,32]{1,0:T(8,128)}', space=vmem, size = 0x1000, scoped, tag = 'scratch operand']
  %s0 = inlined_call_operand.hbm [shape: f32[2,8,32], index: 0, kind: input, shape index: {}]
  %s1 = inlined_call_operand.hbm [shape: f32[32,32], index: 1, kind: input, shape index: {}]
  %s2 = inlined_call_operand.hbm [shape: f32[32,32], index: 2, kind: input, shape index: {}]
  %s3 = inlined_call_operand.vmem [shape: f32[1,32], index: 3, kind: input, shape index: {}]
  %s4 = inlined_call_operand.vmem [shape: f32[1,32], index: 4, kind: input, shape index: {}]
  %s5 = inlined_call_operand.vmem [shape: f32[1,32], index: 5, kind: input, shape index: {}]
  %s6 = inlined_call_operand.vmem [shape: f32[1,32], index: 6, kind: input, shape index: {}]
  %s7 = inlined_call_operand.vmem [shape: f32[1,32], index: 7, kind: input, shape index: {}]
  %s8 = inlined_call_operand.hbm [shape: f32[8,2,8,32], index: 8, kind: output, shape index: {}]
  %s9 = sld [smem:[#allocation0]]
  $region85: #{tpu_custom_call.1} parent=0
    _
  %s11 = ssub.s32 1, %s9
  %s12 = scalar_select 0, %s11, %s9
  $region1: #{tpu_custom_call.1} parent=0
    #allocation3 [shape = 'u8[8192]{0}', space=vmem, size = 0x2000, scoped, tag = 'input window, operand 0']
    #allocation4 [shape = 's32[2]{0}', space=sflag, size = 0x8, scoped, tag = 'scoped memory for tpu_custom_call.1']
    #allocation5 [shape = 's32[2]{0}', space=sflag, size = 0x8, scoped, tag = 'scoped memory for tpu_custom_call.1']
    #allocation6 [shape = 'u8[16384]{0}', space=vmem, size = 0x4000, scoped, tag = 'input window, operand 1, single buffered']
    #allocation7 [shape = 's32[1]{0}', space=sflag, size = 0x4, scoped, tag = 'scoped memory for tpu_custom_call.1']
    #allocation8 [shape = 'u8[16384]{0}', space=vmem, size = 0x4000, scoped, tag = 'input window, operand 2, single buffered']
    #allocation9 [shape = 'u8[8192]{0}', space=vmem, size = 0x2000, scoped, tag = 'output window, operand 0']
    %13 = vsyncpa [#allocation4], 0
    %s14 = scalar_lea.sflag [#allocation4], 1
    %15 = vsyncpa %s14, 0
    %16 = vsyncpa [#allocation7], 0
    %17 = vsyncpa [#allocation5], 0
    %s18 = scalar_lea.sflag [#allocation5], 1
    %19 = vsyncpa %s18, 0
    loop: start=0, step=1, limit=18
    $region2: #{tpu_custom_call.1} parent=1 // loop_pre_header
      _
    $region3: #{tpu_custom_call.1} parent=1 // loop_header
      %s21 = sphi 0, %s25
      %p22 = scmp.ge.s32.totalorder %s21, 18
      %s28 = sphi 0, %s40
      %s29 = sphi 0, %s36
      %s30 = sphi 0, %s28
      %s31 = sphi 0, %s29
      %s32 = sphi 0, %s30
      %s33 = sphi 0, %s31
      %s43 = sphi 0, %s45
      %s46 = sphi 0, %s43
      %s47 = sphi 0, %s46
      %s63 = sphi 0, %s47
      %s67 = sphi 0, %s67
      %s69 = sphi 0, %s67
      %s70 = sphi 0, %s69
      %s84 = sphi 0, %s70
      %s88 = sphi 0, %s88
      %s90 = sphi 0, %s88
      %s91 = sphi 0, %s90
      %s105 = sphi 0, %s91
      %s109 = sphi 0, %s109
      %s111 = sphi 0, %s109
      %s112 = sphi 0, %s111
      %s126 = sphi 0, %s112
      %s130 = sphi 0, %s130
      %s132 = sphi 0, %s130
      %s133 = sphi 0, %s132
      %s147 = sphi 0, %s133
      %s151 = sphi 0, %s151
      %s153 = sphi 0, %s151
      %s154 = sphi 0, %s153
      %s168 = sphi 0, %s154
      %s172 = sphi 0, %s172
      %s174 = sphi 0, %s172
      %s175 = sphi 0, %s174
      %s189 = sphi 0, %s175
      %s193 = sphi 0, %s193
      %s195 = sphi 0, %s193
      %s196 = sphi 0, %s195
      %s210 = sphi 0, %s196
      %s218 = sphi 0, %s220
      %s221 = sphi 0, %s218
      %s222 = sphi 0, %s221
      %s238 = sphi 0, %s222
    $region4: #{tpu_custom_call.1} parent=1 // loop_header_branch
      %24 = sbr.rel (%p22) target = $region8
    $region5: #{tpu_custom_call.1} parent=1 // loop_body
      %s26 = ssub.s32 %s21, 1
      %s27 = ssub.s32 %s21, 2
      %s34 = sadd.s32 1, %s29
      %p35 = scmp.ge.s32.totalorder %s34, 8
      %s36 = scalar_select %p35, 0, %s34
      %s37 = sadd.s32 1, %s28
      %s38 = scalar_select %p35, %s37, %s28
      %p39 = scmp.ge.s32.totalorder %s38, 2
      %s40 = scalar_select %p39, 0, %s38
      %s41 = ssub.s32 %s28, %s40
      %p42 = scmp.eq.s32.totalorder %s41, 0
      %s44 = sadd.s32 %s43, 1
      %s45 = scalar_select %p42, %s43, %s44
      %p48 = pneg %p42
      %p49 = scmp.eq.s32.totalorder %s21, 15
      %p50 = por %p48, %p49
      %p51 = scmp.ne.s32.totalorder %s43, %s46
      %p52 = scmp.eq.s32.totalorder %s21, 0
      %p53 = por %p51, %p52
      %p54 = scmp.ne.s32.totalorder %s43, %s46
      %p55 = scmp.eq.s32.totalorder %s26, 15
      %p56 = por %p54, %p55
      %p57 = scmp.ne.s32.totalorder %s46, %s47
      %p58 = scmp.eq.s32.totalorder %s26, 0
      %p59 = por %p57, %p58
      %p60 = scmp.ne.s32.totalorder %s46, %s47
      %p61 = scmp.eq.s32.totalorder %s27, 15
      %p62 = por %p60, %p61
      %p64 = scmp.ne.s32.totalorder %s47, %s63
      %p65 = scmp.eq.s32.totalorder %s27, 0
      %p66 = por %p64, %p65
      %s68 = sadd.s32 %s67, 1
      %p71 = scmp.eq.s32.totalorder %s21, 15
      %p72 = scmp.ne.s32.totalorder %s67, %s69
      %p73 = scmp.eq.s32.totalorder %s21, 0
      %p74 = por %p72, %p73
      %p75 = scmp.ne.s32.totalorder %s67, %s69
      %p76 = scmp.eq.s32.totalorder %s26, 15
      %p77 = por %p75, %p76
      %p78 = scmp.ne.s32.totalorder %s69, %s70
      %p79 = scmp.eq.s32.totalorder %s26, 0
      %p80 = por %p78, %p79
      %p81 = scmp.ne.s32.totalorder %s69, %s70
      %p82 = scmp.eq.s32.totalorder %s27, 15
      %p83 = por %p81, %p82
      %p85 = scmp.ne.s32.totalorder %s70, %s84
      %p86 = scmp.eq.s32.totalorder %s27, 0
      %p87 = por %p85, %p86
      %s89 = sadd.s32 %s88, 1
      %p92 = scmp.eq.s32.totalorder %s21, 15
      %p93 = scmp.ne.s32.totalorder %s88, %s90
      %p94 = scmp.eq.s32.totalorder %s21, 0
      %p95 = por %p93, %p94
      %p96 = scmp.ne.s32.totalorder %s88, %s90
      %p97 = scmp.eq.s32.totalorder %s26, 15
      %p98 = por %p96, %p97
      %p99 = scmp.ne.s32.totalorder %s90, %s91
      %p100 = scmp.eq.s32.totalorder %s26, 0
      %p101 = por %p99, %p100
      %p102 = scmp.ne.s32.totalorder %s90, %s91
      %p103 = scmp.eq.s32.totalorder %s27, 15
      %p104 = por %p102, %p103
      %p106 = scmp.ne.s32.totalorder %s91, %s105
      %p107 = scmp.eq.s32.totalorder %s27, 0
      %p108 = por %p106, %p107
      %s110 = sadd.s32 %s109, 1
      %p113 = scmp.eq.s32.totalorder %s21, 15
      %p114 = scmp.ne.s32.totalorder %s109, %s111
      %p115 = scmp.eq.s32.totalorder %s21, 0
      %p116 = por %p114, %p115
      %p117 = scmp.ne.s32.totalorder %s109, %s111
      %p118 = scmp.eq.s32.totalorder %s26, 15
      %p119 = por %p117, %p118
      %p120 = scmp.ne.s32.totalorder %s111, %s112
      %p121 = scmp.eq.s32.totalorder %s26, 0
      %p122 = por %p120, %p121
      %p123 = scmp.ne.s32.totalorder %s111, %s112
      %p124 = scmp.eq.s32.totalorder %s27, 15
      %p125 = por %p123, %p124
      %p127 = scmp.ne.s32.totalorder %s112, %s126
      %p128 = scmp.eq.s32.totalorder %s27, 0
      %p129 = por %p127, %p128
      %s131 = sadd.s32 %s130, 1
      %p134 = scmp.eq.s32.totalorder %s21, 15
      %p135 = scmp.ne.s32.totalorder %s130, %s132
      %p136 = scmp.eq.s32.totalorder %s21, 0
      %p137 = por %p135, %p136
      %p138 = scmp.ne.s32.totalorder %s130, %s132
      %p139 = scmp.eq.s32.totalorder %s26, 15
      %p140 = por %p138, %p139
      %p141 = scmp.ne.s32.totalorder %s132, %s133
      %p142 = scmp.eq.s32.totalorder %s26, 0
      %p143 = por %p141, %p142
      %p144 = scmp.ne.s32.totalorder %s132, %s133
      %p145 = scmp.eq.s32.totalorder %s27, 15
      %p146 = por %p144, %p145
      %p148 = scmp.ne.s32.totalorder %s133, %s147
      %p149 = scmp.eq.s32.totalorder %s27, 0
      %p150 = por %p148, %p149
      %s152 = sadd.s32 %s151, 1
      %p155 = scmp.eq.s32.totalorder %s21, 15
      %p156 = scmp.ne.s32.totalorder %s151, %s153
      %p157 = scmp.eq.s32.totalorder %s21, 0
      %p158 = por %p156, %p157
      %p159 = scmp.ne.s32.totalorder %s151, %s153
      %p160 = scmp.eq.s32.totalorder %s26, 15
      %p161 = por %p159, %p160
      %p162 = scmp.ne.s32.totalorder %s153, %s154
      %p163 = scmp.eq.s32.totalorder %s26, 0
      %p164 = por %p162, %p163
      %p165 = scmp.ne.s32.totalorder %s153, %s154
      %p166 = scmp.eq.s32.totalorder %s27, 15
      %p167 = por %p165, %p166
      %p169 = scmp.ne.s32.totalorder %s154, %s168
      %p170 = scmp.eq.s32.totalorder %s27, 0
      %p171 = por %p169, %p170
      %s173 = sadd.s32 %s172, 1
      %p176 = scmp.eq.s32.totalorder %s21, 15
      %p177 = scmp.ne.s32.totalorder %s172, %s174
      %p178 = scmp.eq.s32.totalorder %s21, 0
      %p179 = por %p177, %p178
      %p180 = scmp.ne.s32.totalorder %s172, %s174
      %p181 = scmp.eq.s32.totalorder %s26, 15
      %p182 = por %p180, %p181
      %p183 = scmp.ne.s32.totalorder %s174, %s175
      %p184 = scmp.eq.s32.totalorder %s26, 0
      %p185 = por %p183, %p184
      %p186 = scmp.ne.s32.totalorder %s174, %s175
      %p187 = scmp.eq.s32.totalorder %s27, 15
      %p188 = por %p186, %p187
      %p190 = scmp.ne.s32.totalorder %s175, %s189
      %p191 = scmp.eq.s32.totalorder %s27, 0
      %p192 = por %p190, %p191
      %s194 = sadd.s32 %s193, 1
      %p197 = scmp.eq.s32.totalorder %s21, 15
      %p198 = scmp.ne.s32.totalorder %s193, %s195
      %p199 = scmp.eq.s32.totalorder %s21, 0
      %p200 = por %p198, %p199
      %p201 = scmp.ne.s32.totalorder %s193, %s195
      %p202 = scmp.eq.s32.totalorder %s26, 15
      %p203 = por %p201, %p202
      %p204 = scmp.ne.s32.totalorder %s195, %s196
      %p205 = scmp.eq.s32.totalorder %s26, 0
      %p206 = por %p204, %p205
      %p207 = scmp.ne.s32.totalorder %s195, %s196
      %p208 = scmp.eq.s32.totalorder %s27, 15
      %p209 = por %p207, %p208
      %p211 = scmp.ne.s32.totalorder %s196, %s210
      %p212 = scmp.eq.s32.totalorder %s27, 0
      %p213 = por %p211, %p212
      %s214 = ssub.s32 %s29, %s36
      %s215 = ssub.s32 %s28, %s40
      %s216 = sor.u32 %s214, %s215
      %p217 = scmp.eq.s32.totalorder %s216, 0
      %s219 = sadd.s32 %s218, 1
      %s220 = scalar_select %p217, %s218, %s219
      %p223 = pneg %p217
      %p224 = scmp.eq.s32.totalorder %s21, 15
      %p225 = por %p223, %p224
      %p226 = scmp.ne.s32.totalorder %s218, %s221
      %p227 = scmp.eq.s32.totalorder %s21, 0
      %p228 = por %p226, %p227
      %p229 = scmp.ne.s32.totalorder %s218, %s221
      %p230 = scmp.eq.s32.totalorder %s26, 15
      %p231 = por %p229, %p230
      %p232 = scmp.ne.s32.totalorder %s221, %s222
      %p233 = scmp.eq.s32.totalorder %s26, 0
      %p234 = por %p232, %p233
      %p235 = scmp.ne.s32.totalorder %s221, %s222
      %p236 = scmp.eq.s32.totalorder %s27, 15
      %p237 = por %p235, %p236
      %p239 = scmp.ne.s32.totalorder %s222, %s238
      %p240 = scmp.eq.s32.totalorder %s27, 0
      %p241 = por %p239, %p240
      %p242 = scmp.le.s32.totalorder 1, %s21
      %p243 = scmp.lt.s32.totalorder %s21, 17
      %p244 = pnand %p242, %p243
      %p245 = pneg %p244
      // Predicated region
      $region9: #{tpu_custom_call.1} parent=5 // pred_check
        _
      $region10: #{tpu_custom_call.1} parent=5 // pred_check_branch
        %247 = sbr.rel (%p244) target = $region12
      $region11: #{tpu_custom_call.1} parent=5 // pred_region
        %s248 = ssub.s32 %s21, 1
        // Predicated region
        $region13: #{tpu_custom_call.1} parent=11 // pred_check
          %p249 = pneg %p80
        $region14: #{tpu_custom_call.1} parent=11 // pred_check_branch
          %251 = sbr.rel (%p249) target = $region16
        $region15: #{tpu_custom_call.1} parent=11 // pred_region
          %s253 = ssub.s32 512, 512
          %254 = vsyncadd [#allocation7], %s253
          %s255 = sshll.u32 [#allocation6], 4
          %s256 = int_to_ptr.vmem [resolvable:$true] %s255
          %261 = dma.hbm_to_vmem [thread:$0]  %s1, 512, %s256, [#allocation7], 128, 128, 8
        $region16: #{tpu_custom_call.1} parent=11 // pred_fallthru
          _
        // Predicated region
        $region17: #{tpu_custom_call.1} parent=11 // pred_check
          %p262 = pneg %p101
        $region18: #{tpu_custom_call.1} parent=11 // pred_check_branch
          %264 = sbr.rel (%p262) target = $region20
        $region19: #{tpu_custom_call.1} parent=11 // pred_region
          %s266 = ssub.s32 512, 512
          %267 = vsyncadd [#allocation7], %s266
          %s268 = sshll.u32 [#allocation8], 4
          %s269 = int_to_ptr.vmem [resolvable:$true] %s268
          %274 = dma.hbm_to_vmem [thread:$0]  %s2, 512, %s269, [#allocation7], 128, 128, 8
        $region20: #{tpu_custom_call.1} parent=11 // pred_fallthru
          _
        // Predicated region
        $region21: #{tpu_custom_call.1} parent=11 // pred_check
          %p275 = pneg %p122
        $region22: #{tpu_custom_call.1} parent=11 // pred_check_branch
          %277 = sbr.rel (%p275) target = $region24
        $region23: #{tpu_custom_call.1} parent=11 // pred_region
          _
        $region24: #{tpu_custom_call.1} parent=11 // pred_fallthru
          _
        // Predicated region
        $region25: #{tpu_custom_call.1} parent=11 // pred_check
          %p278 = pneg %p143
        $region26: #{tpu_custom_call.1} parent=11 // pred_check_branch
          %280 = sbr.rel (%p278) target = $region28
        $region27: #{tpu_custom_call.1} parent=11 // pred_region
          _
        $region28: #{tpu_custom_call.1} parent=11 // pred_fallthru
          _
        // Predicated region
        $region29: #{tpu_custom_call.1} parent=11 // pred_check
          %p281 = pneg %p164
        $region30: #{tpu_custom_call.1} parent=11 // pred_check_branch
          %283 = sbr.rel (%p281) target = $region32
        $region31: #{tpu_custom_call.1} parent=11 // pred_region
          _
        $region32: #{tpu_custom_call.1} parent=11 // pred_fallthru
          _
        // Predicated region
        $region33: #{tpu_custom_call.1} parent=11 // pred_check
          %p284 = pneg %p185
        $region34: #{tpu_custom_call.1} parent=11 // pred_check_branch
          %286 = sbr.rel (%p284) target = $region36
        $region35: #{tpu_custom_call.1} parent=11 // pred_region
          _
        $region36: #{tpu_custom_call.1} parent=11 // pred_fallthru
          _
        // Predicated region
        $region37: #{tpu_custom_call.1} parent=11 // pred_check
          %p287 = pneg %p206
        $region38: #{tpu_custom_call.1} parent=11 // pred_check_branch
          %289 = sbr.rel (%p287) target = $region40
        $region39: #{tpu_custom_call.1} parent=11 // pred_region
          _
        $region40: #{tpu_custom_call.1} parent=11 // pred_fallthru
          _
      $region12: #{tpu_custom_call.1} parent=5 // pred_fallthru
        _
      %p290 = scmp.lt.s32.totalorder %s21, 16
      // Predicated region
      $region41: #{tpu_custom_call.1} parent=5 // pred_check
        %p291 = pneg %p290
      $region42: #{tpu_custom_call.1} parent=5 // pred_check_branch
        %293 = sbr.rel (%p291) target = $region44
      $region43: #{tpu_custom_call.1} parent=5 // pred_region
        // Predicated region
        $region45: #{tpu_custom_call.1} parent=43 // pred_check
          %p294 = pneg %p53
        $region46: #{tpu_custom_call.1} parent=43 // pred_check_branch
          %296 = sbr.rel (%p294) target = $region48
        $region47: #{tpu_custom_call.1} parent=43 // pred_region
          %s297 = sand.u32 %s43, 1
          %s298 = scalar_lea.sflag [#allocation4], %s297
          %s299 = sand.u32 %s43, 1
          %s300 = smul.addr %s299, 8
          %s301 = scalar_lea.vmem [#allocation3], %s300
          %s303 = ssub.s32 128, 128
          %304 = vsyncadd %s298, %s303
          %s305 = smul.addr %s28, 128
          %s306 = scalar_lea.hbm %s0, %s305
          %s308 = sshll.u32 %s301, 4
          %s309 = int_to_ptr.vmem [resolvable:$true] %s308
          %311 = dma.hbm_to_vmem [thread:$0]  %s306, 128, %s309, %s298
        $region48: #{tpu_custom_call.1} parent=43 // pred_fallthru
          _
      $region44: #{tpu_custom_call.1} parent=5 // pred_fallthru
        _
      %p312 = scmp.le.s32.totalorder 1, %s21
      %p313 = scmp.lt.s32.totalorder %s21, 17
      %p314 = pnand %p312, %p313
      %p315 = pneg %p314
      // Predicated region
      $region49: #{tpu_custom_call.1} parent=5 // pred_check
        _
      $region50: #{tpu_custom_call.1} parent=5 // pred_check_branch
        %317 = sbr.rel (%p314) target = $region52
      $region51: #{tpu_custom_call.1} parent=5 // pred_region
        %s318 = ssub.s32 %s21, 1
        %s319 = sand.u32 %s46, 1
        %s320 = scalar_lea.sflag [#allocation4], %s319
        %s321 = sand.u32 %s46, 1
        %s322 = smul.addr %s321, 8
        %s323 = scalar_lea.vmem [#allocation3], %s322
        // Predicated region
        $region53: #{tpu_custom_call.1} parent=51 // pred_check
          %p324 = pneg %p59
        $region54: #{tpu_custom_call.1} parent=51 // pred_check_branch
          %326 = sbr.rel (%p324) target = $region56
        $region55: #{tpu_custom_call.1} parent=51 // pred_region
          %327 = dma.done %s320, 128
        $region56: #{tpu_custom_call.1} parent=51 // pred_fallthru
          _
        // Predicated region
        $region57: #{tpu_custom_call.1} parent=51 // pred_check
          %p328 = pneg %p80
        $region58: #{tpu_custom_call.1} parent=51 // pred_check_branch
          %330 = sbr.rel (%p328) target = $region60
        $region59: #{tpu_custom_call.1} parent=51 // pred_region
          %331 = dma.done [#allocation7], 512
        $region60: #{tpu_custom_call.1} parent=51 // pred_fallthru
          _
        // Predicated region
        $region61: #{tpu_custom_call.1} parent=51 // pred_check
          %p332 = pneg %p101
        $region62: #{tpu_custom_call.1} parent=51 // pred_check_branch
          %334 = sbr.rel (%p332) target = $region64
        $region63: #{tpu_custom_call.1} parent=51 // pred_region
          %335 = dma.done [#allocation7], 512
        $region64: #{tpu_custom_call.1} parent=51 // pred_fallthru
          _
        %s336 = sand.u32 %s46, 1
        %s337 = scalar_lea.sflag [#allocation4], %s336
        %s338 = sand.u32 %s46, 1
        %s339 = smul.addr %s338, 8
        %s340 = scalar_lea.vmem [#allocation3], %s339
        %p341 = pneg %p59
        %p342 = pneg %p56
        %p343 = pneg %p80
        %p344 = pneg %p77
        %p345 = pneg %p101
        %p346 = pneg %p98
        %p347 = pneg %p122
        %p348 = pneg %p119
        %p349 = pneg %p143
        %p350 = pneg %p140
        %p351 = pneg %p164
        %p352 = pneg %p161
        %p353 = pneg %p185
        %p354 = pneg %p182
        %p355 = pneg %p206
        %p356 = pneg %p203
        %p357 = pneg %p234
        %p358 = pneg %p231
        %s359 = sand.u32 %s221, 1
        %s360 = scalar_lea.sflag [#allocation5], %s359
        %s361 = sand.u32 %s221, 1
        %s362 = smul.addr %s361, 8
        %s363 = scalar_lea.vmem [#allocation9], %s362
        %p364 = scmp.eq.s32.totalorder %s31, 0
        // Predicated region
        $region65: #{tpu_custom_call.1} parent=51 // pred_check
          %p365 = pneg %p364
        $region66: #{tpu_custom_call.1} parent=51 // pred_check_branch
          %367 = sbr.rel (%p365) target = $region68
        $region67: #{tpu_custom_call.1} parent=51 // pred_region
          %v368 = vld [vmem:[%s323] sm:$0xff]
          %v369 = vld [vmem:[%s4] sm:$0x1]
          %v370 = vld [vmem:[%s5] sm:$0x1]
          %vm371 = vcmask 261120
          %v372 = vsel %vm371, %v368, 0.0
          %373 = vadd.xlane.f32.xlu0 %v372
          %v374 = vpop.xlane.xlu0 %373
          %v375 = vrcp.pop 32.0
          %v376 = vmul.f32 %v374, %v375
          %v377 = vsub.f32 %v368, %v376
          %v378 = vmul.f32 %v377, %v377
          %v379 = vsel %vm371, %v378, 0.0
          %380 = vadd.xlane.f32.xlu0 %v379
          %v381 = vpop.xlane.xlu0 %380
          %v382 = vmul.f32 %v381, %v375
          %v383 = vadd.f32 %v382, 1e-05
          %v384 = vrsqrt.pop %v383
          %v385 = vmul.f32 %v377, %v384
          %v387 = vlaneseq
          %v388 = vshrl.u32 %v387, 7
          %v389 = vsub.s32 0, %v388
          %v390 = vrot.slane %v369, %v389
          %v392 = vmul.f32 %v385, %v390
          %v394 = vlaneseq
          %v395 = vshrl.u32 %v394, 7
          %v396 = vsub.s32 0, %v395
          %v397 = vrot.slane %v370, %v396
          %v399 = vadd.f32 %v392, %v397
          %v400 = vld [vmem:[%s6] sm:$0x1]
          %v401 = vld [vmem:[%s7] sm:$0x1]
          %v402 = vsel %vm371, %v399, 0.0
          %403 = vadd.xlane.f32.xlu0 %v402
          %v404 = vpop.xlane.xlu0 %403
          %v405 = vmul.f32 %v404, %v375
          %v406 = vsub.f32 %v399, %v405
          %v407 = vmul.f32 %v406, %v406
          %v408 = vsel %vm371, %v407, 0.0
          %409 = vadd.xlane.f32.xlu0 %v408
          %v410 = vpop.xlane.xlu0 %409
          %v411 = vmul.f32 %v410, %v375
          %v412 = vadd.f32 %v411, 1e-05
          %v413 = vrsqrt.pop %v412
          %v414 = vmul.f32 %v406, %v413
          %v416 = vlaneseq
          %v417 = vshrl.u32 %v416, 7
          %v418 = vsub.s32 0, %v417
          %v419 = vrot.slane %v400, %v418
          %v421 = vmul.f32 %v414, %v419
          %v423 = vlaneseq
          %v424 = vshrl.u32 %v423, 7
          %v425 = vsub.s32 0, %v424
          %v426 = vrot.slane %v401, %v425
          %v428 = vadd.f32 %v421, %v426
          %429 = vst.msk [vmem:[#allocation2] sm:$0xff] %vm371, %v428
        $region68: #{tpu_custom_call.1} parent=51 // pred_fallthru
          _
        %p430 = scmp.gt.s32.totalorder %s31, 0
        // Predicated region
        $region69: #{tpu_custom_call.1} parent=51 // pred_check
          %p431 = pneg %p430
        $region70: #{tpu_custom_call.1} parent=51 // pred_check_branch
          %433 = sbr.rel (%p431) target = $region72
        $region71: #{tpu_custom_call.1} parent=51 // pred_region
          %v434 = vld [vmem:[#allocation2] sm:$0x7f]
          %v435 = vld [vmem:[#allocation2 + $0x1] sm:$0x7f]
          %v436 = vld [vmem:[#allocation6] sm:$0xff]
          %v437 = vld [vmem:[#allocation6 + $0x8] sm:$0xff]
          %v438 = vld [vmem:[#allocation6 + $0x10] sm:$0xff]
          %v439 = vld [vmem:[#allocation6 + $0x18] sm:$0xff]
          %v440 = vld [vmem:[#allocation8] sm:$0xff]
          %v441 = vld [vmem:[#allocation8 + $0x8] sm:$0xff]
          %v442 = vld [vmem:[#allocation8 + $0x10] sm:$0xff]
          %v443 = vld [vmem:[#allocation8 + $0x18] sm:$0xff]
          %vm444 = vcmask 261120
          %v446 = vsel %vm444, %v435, 0
          %448 = vmatprep.subr.mxu0 0.0
          %449 = vmatpush1.msra.mxu0 %v440
          %450 = vmatprep.subr.mxu0 0.0
          %451 = vmatpush1.msra.mxu0 %v441
          %452 = vmatprep.subr.mxu0 0.0
          %453 = vmatpush1.msra.mxu0 %v442
          %454 = vmatprep.subr.mxu0 0.0
          %455 = vmatpush1.msra.mxu0 %v443
          %456 = vmatprep.subr.mxu0 0.0
          %457 = vmatpush1.msra.mxu0 0.0
          %458 = vmatprep.subr.mxu0 0.0
          %459 = vmatpush1.msra.mxu0 0.0
          %460 = vmatprep.subr.mxu0 0.0
          %461 = vmatpush1.msra.mxu0 0.0
          %462 = vmatprep.subr.mxu0 0.0
          %463 = vmatpush1.msra.mxu0 0.0
          %464 = vmatprep.subr.mxu0 0.0
          %465 = vmatpush1.msra.mxu0 0.0
          %466 = vmatprep.subr.mxu0 0.0
          %467 = vmatpush1.msra.mxu0 0.0
          %468 = vmatprep.subr.mxu0 0.0
          %469 = vmatpush1.msra.mxu0 0.0
          %470 = vmatprep.subr.mxu0 0.0
          %471 = vmatpush1.msra.mxu0 0.0
          %472 = vmatprep.subr.mxu0 0.0
          %473 = vmatpush1.msra.mxu0 0.0
          %474 = vmatprep.subr.mxu0 0.0
          %475 = vmatpush1.msra.mxu0 0.0
          %476 = vmatprep.subr.mxu0 0.0
          %477 = vmatpush1.msra.mxu0 0.0
          %478 = vmatprep.subr.mxu0 0.0
          %479 = vmatpush1.msra.mxu0 0.0
          %480 = vmatprep.subr.mxu0 0.0
          %481 = vmatpush1.msra.mxu0 0.0
          %482 = vmatprep.subr.mxu0 0.0
          %483 = vmatpush1.msra.mxu0 0.0
          %484 = vmatprep.subr.mxu0 0.0
          %485 = vmatpush1.msra.mxu0 0.0
          %486 = vmatprep.subr.mxu0 0.0
          %487 = vmatpush1.msra.mxu0 0.0
          %488 = vmatprep.subr.mxu0 0.0
          %489 = vmatpush1.msra.mxu0 0.0
          %490 = vmatprep.subr.mxu0 0.0
          %491 = vmatpush1.msra.mxu0 0.0
          %492 = vmatprep.subr.mxu0 0.0
          %493 = vmatpush1.msra.mxu0 0.0
          %494 = vmatprep.subr.mxu0 0.0
          %495 = vmatpush1.msra.mxu0 0.0
          %496 = vmatprep.subr.mxu0 0.0
          %497 = vmatpush1.msra.mxu0 0.0
          %498 = vmatprep.subr.mxu0 0.0
          %499 = vmatpush1.msra.mxu0 0.0
          %500 = vmatprep.subr.mxu0 0.0
          %501 = vmatpush1.msra.mxu0 0.0
          %502 = vmatprep.subr.mxu0 0.0
          %503 = vmatpush1.msra.mxu0 0.0
          %504 = vmatprep.subr.mxu0 0.0
          %505 = vmatpush1.msra.mxu0 0.0
          %506 = vmatprep.subr.mxu0 0.0
          %507 = vmatpush1.msra.mxu0 0.0
          %508 = vmatprep.subr.mxu0 0.0
          %509 = vmatpush1.msra.mxu0 0.0
          %510 = vmatprep.subr.mxu0 0.0
          %511 = vmatpush1.msra.mxu0 0.0
          %512 = vmatprep.mubr.f32.mxu0 0.0
          %513 = vmatmul.mubr.f32.gmra.mrb[0].mxu0 %v446
          %v514 = vpop.f32.mrb[0].mxu0
          %v515 = vadd.f32 0.0, %v514
          %v516 = vpop.f32.mrb[0].mxu0
          %517 = vdwg.mxu0
          %v519 = vsel %vm444, %v434, 0
          %521 = vmatprep.subr.mxu0 0.0
          %522 = vmatpush1.msra.mxu0 %v436
          %523 = vmatprep.subr.mxu0 0.0
          %524 = vmatpush1.msra.mxu0 %v437
          %525 = vmatprep.subr.mxu0 0.0
          %526 = vmatpush1.msra.mxu0 %v438
          %527 = vmatprep.subr.mxu0 0.0
          %528 = vmatpush1.msra.mxu0 %v439
          %529 = vmatprep.subr.mxu0 0.0
          %530 = vmatpush1.msra.mxu0 0.0
          %531 = vmatprep.subr.mxu0 0.0
          %532 = vmatpush1.msra.mxu0 0.0
          %533 = vmatprep.subr.mxu0 0.0
          %534 = vmatpush1.msra.mxu0 0.0
          %535 = vmatprep.subr.mxu0 0.0
          %536 = vmatpush1.msra.mxu0 0.0
          %537 = vmatprep.subr.mxu0 0.0
          %538 = vmatpush1.msra.mxu0 0.0
          %539 = vmatprep.subr.mxu0 0.0
          %540 = vmatpush1.msra.mxu0 0.0
          %541 = vmatprep.subr.mxu0 0.0
          %542 = vmatpush1.msra.mxu0 0.0
          %543 = vmatprep.subr.mxu0 0.0
          %544 = vmatpush1.msra.mxu0 0.0
          %545 = vmatprep.subr.mxu0 0.0
          %546 = vmatpush1.msra.mxu0 0.0
          %547 = vmatprep.subr.mxu0 0.0
          %548 = vmatpush1.msra.mxu0 0.0
          %549 = vmatprep.subr.mxu0 0.0
          %550 = vmatpush1.msra.mxu0 0.0
          %551 = vmatprep.subr.mxu0 0.0
          %552 = vmatpush1.msra.mxu0 0.0
          %553 = vmatprep.subr.mxu0 0.0
          %554 = vmatpush1.msra.mxu0 0.0
          %555 = vmatprep.subr.mxu0 0.0
          %556 = vmatpush1.msra.mxu0 0.0
          %557 = vmatprep.subr.mxu0 0.0
          %558 = vmatpush1.msra.mxu0 0.0
          %559 = vmatprep.subr.mxu0 0.0
          %560 = vmatpush1.msra.mxu0 0.0
          %561 = vmatprep.subr.mxu0 0.0
          %562 = vmatpush1.msra.mxu0 0.0
          %563 = vmatprep.subr.mxu0 0.0
          %564 = vmatpush1.msra.mxu0 0.0
          %565 = vmatprep.subr.mxu0 0.0
          %566 = vmatpush1.msra.mxu0 0.0
          %567 = vmatprep.subr.mxu0 0.0
          %568 = vmatpush1.msra.mxu0 0.0
          %569 = vmatprep.subr.mxu0 0.0
          %570 = vmatpush1.msra.mxu0 0.0
          %571 = vmatprep.subr.mxu0 0.0
          %572 = vmatpush1.msra.mxu0 0.0
          %573 = vmatprep.subr.mxu0 0.0
          %574 = vmatpush1.msra.mxu0 0.0
          %575 = vmatprep.subr.mxu0 0.0
          %576 = vmatpush1.msra.mxu0 0.0
          %577 = vmatprep.subr.mxu0 0.0
          %578 = vmatpush1.msra.mxu0 0.0
          %579 = vmatprep.subr.mxu0 0.0
          %580 = vmatpush1.msra.mxu0 0.0
          %581 = vmatprep.subr.mxu0 0.0
          %582 = vmatpush1.msra.mxu0 0.0
          %583 = vmatprep.subr.mxu0 0.0
          %584 = vmatpush1.msra.mxu0 0.0
          %585 = vmatprep.mubr.f32.mxu0 0.0
          %586 = vmatmul.mubr.f32.gmra.mrb[0].mxu0 %v519
          %v587 = vpop.f32.mrb[0].mxu0
          %v588 = vadd.f32 %v515, %v587
          %v589 = vpop.f32.mrb[0].mxu0
          %590 = vdwg.mxu0
          %v591 = vld [vmem:[%s3] sm:$0x1]
          %v593 = vlaneseq
          %v594 = vshrl.u32 %v593, 7
          %v595 = vsub.s32 0, %v594
          %v596 = vrot.slane %v591, %v595
          %v598 = vadd.f32 %v588, %v596
          %v599 = vld [vmem:[%s6] sm:$0x1]
          %v600 = vld [vmem:[%s7] sm:$0x1]
          %vm601 = vcmask 260096
          %v602 = vsel %vm601, %v598, 0.0
          %603 = vadd.xlane.f32.xlu0 %v602
          %v604 = vpop.xlane.xlu0 %603
          %v605 = vrcp.pop 32.0
          %v606 = vmul.f32 %v604, %v605
          %v607 = vsub.f32 %v598, %v606
          %v608 = vmul.f32 %v607, %v607
          %v609 = vsel %vm601, %v608, 0.0
          %610 = vadd.xlane.f32.xlu0 %v609
          %v611 = vpop.xlane.xlu0 %610
          %v612 = vmul.f32 %v611, %v605
          %v613 = vadd.f32 %v612, 1e-05
          %v614 = vrsqrt.pop %v613
          %v615 = vmul.f32 %v607, %v614
          %v617 = vlaneseq
          %v618 = vshrl.u32 %v617, 7
          %v619 = vsub.s32 0, %v618
          %v620 = vrot.slane %v599, %v619
          %v622 = vmul.f32 %v615, %v620
          %v624 = vlaneseq
          %v625 = vshrl.u32 %v624, 7
          %v626 = vsub.s32 0, %v625
          %v627 = vrot.slane %v600, %v626
          %v629 = vadd.f32 %v622, %v627
          %630 = vst.msk [vmem:[#allocation2] sm:$0x7f] %vm601, %v629
        $region72: #{tpu_custom_call.1} parent=51 // pred_fallthru
          _
        %v631 = vld [vmem:[#allocation2] sm:$0xff]
        %vm632 = vcmask 261120
        %633 = vst.msk [vmem:[%s363] sm:$0xff] %vm632, %v631
        %s634 = sand.u32 %s221, 1
        %s635 = scalar_lea.sflag [#allocation5], %s634
        %s636 = sand.u32 %s221, 1
        %s637 = smul.addr %s636, 8
        %s638 = scalar_lea.vmem [#allocation9], %s637
        // Predicated region
        $region73: #{tpu_custom_call.1} parent=51 // pred_check
          %p639 = pneg %p231
        $region74: #{tpu_custom_call.1} parent=51 // pred_check_branch
          %641 = sbr.rel (%p639) target = $region76
        $region75: #{tpu_custom_call.1} parent=51 // pred_region
          %s643 = ssub.s32 128, 128
          %644 = vsyncadd %s635, %s643
          %s645 = smul.addr %s31, 2
          %s646 = sadd.s32 %s30, %s645
          %s647 = smul.addr %s646, 128
          %s648 = scalar_lea.hbm %s8, %s647
          %s650 = sshll.u32 %s638, 4
          %s651 = int_to_ptr.vmem [resolvable:$true] %s650
          %653 = dma.vmem_to_hbm [thread:$0]  %s651, 128, %s648, %s635
        $region76: #{tpu_custom_call.1} parent=51 // pred_fallthru
          _
      $region52: #{tpu_custom_call.1} parent=5 // pred_fallthru
        _
      %p654 = scmp.le.s32.totalorder 2, %s21
      // Predicated region
      $region77: #{tpu_custom_call.1} parent=5 // pred_check
        %p655 = pneg %p654
      $region78: #{tpu_custom_call.1} parent=5 // pred_check_branch
        %657 = sbr.rel (%p655) target = $region80
      $region79: #{tpu_custom_call.1} parent=5 // pred_region
        %s658 = ssub.s32 %s21, 2
        // Predicated region
        $region81: #{tpu_custom_call.1} parent=79 // pred_check
          %p659 = pneg %p237
        $region82: #{tpu_custom_call.1} parent=79 // pred_check_branch
          %661 = sbr.rel (%p659) target = $region84
        $region83: #{tpu_custom_call.1} parent=79 // pred_region
          %s662 = sand.u32 %s222, 1
          %s663 = scalar_lea.sflag [#allocation5], %s662
          %s664 = sand.u32 %s222, 1
          %s665 = smul.addr %s664, 8
          %s666 = scalar_lea.vmem [#allocation9], %s665
          %667 = dma.done %s663, 128
        $region84: #{tpu_custom_call.1} parent=79 // pred_fallthru
          _
      $region80: #{tpu_custom_call.1} parent=5 // pred_fallthru
        _
    $region6: #{tpu_custom_call.1} parent=1 // loop_footer
      %s25 = sadd.s32 1, %s21
    $region7: #{tpu_custom_call.1} parent=1 // loop_footer_branch
      %20 = sbr.rel target = $region3
    $region8: #{tpu_custom_call.1} parent=1 // loop_exit
      _
    %668 = vsyncpa [#allocation4], 1
    %s669 = scalar_lea.sflag [#allocation4], 1
    %670 = vsyncpa %s669, 1
    %671 = vsyncpa [#allocation7], 1
    %672 = vsyncpa [#allocation5], 1
    %s673 = scalar_lea.sflag [#allocation5], 1
    %674 = vsyncpa %s673, 1

</llo_original>
